<compile_context>
chip_gen: v7x
topology: tpu7x:2x2x1
jax: 0.10.0
libtpu: 0.0.40
codegen_flags: <defaults>
</compile_context>

<pallas_src>
import functools

import jax
import jax.numpy as jnp
from jax import lax
from jax.experimental import pallas as pl
from jax.experimental.pallas import tpu as pltpu

LANES = 128
MAX_BLOCK_ROWS = 2048   # 2048 x 128 f32 = 1 MiB per input buffer


def _pow(x, gamma):
    """x ** gamma; explicit multiplies for small integer gamma (VPU only)."""
    g = float(gamma)
    if g == int(g) and 0 <= int(g) <= 4:
        gi = int(g)
        if gi == 0:
            return jnp.ones_like(x)
        r = x
        for _ in range(gi - 1):
            r = r * x
        return r
    return x ** g


def _num_tensorcores():
    """Best-effort TensorCores per chip: 1 on v5e/v6e, 2 on v7x/megacore."""
    try:
        info = pltpu.get_tpu_info()
        for attr in ("num_cores", "core_count", "num_tensorcores",
                     "tensorcores_per_chip"):
            v = getattr(info, attr, None)
            if isinstance(v, int) and v > 0:
                return v
    except Exception:
        pass
    try:
        kind = jax.devices()[0].device_kind.lower()
    except Exception:
        return 1
    return 2 if "v7" in kind else 1


def _focal_loss_kernel(p_ref, t_ref, o_ref, *, gamma, alpha, n_full_rows,
                       n_rem, block_rows, steps_per_part, has_tail):
    c = pl.program_id(0)   # part (TensorCore on multi-TC chips)
    j = pl.program_id(1)   # reduction steps within the part

    @pl.when(j == 0)
    def _():
        o_ref[...] = jnp.zeros_like(o_ref)

    p = p_ref[...].astype(jnp.float32)
    t = t_ref[...].astype(jnp.float32)

    # Stable shared-transcendental formulation:
    #   e         = exp(-|p|)
    #   log(pt)   = min(p, 0) - log(1 + e)        (= log sigmoid(p))
    #   log(1-pt) = log(pt) - p                   (= log sigmoid(-p))
    #   pt        = where(p >= 0, 1, e) * rcp(1 + e)
    e = jnp.exp(-jnp.abs(p))
    one_plus_e = 1.0 + e
    log_pt = jnp.minimum(p, 0.0) - jnp.log(one_plus_e)
    log_1mpt = log_pt - p
    inv = pl.reciprocal(one_plus_e, approx=True)   # EUP slot; frees the VALU
    pt = jnp.where(p >= 0, 1.0, e) * inv
    one_minus_pt = 1.0 - pt

    # loss = -a*(1-pt)^g * t * log(pt) - (1-a)*pt^g * (1-t) * log(1-pt)
    loss = (-alpha * _pow(one_minus_pt, gamma) * t * log_pt
            - (1.0 - alpha) * _pow(pt, gamma) * (1.0 - t) * log_1mpt)

    def _accumulate(x):
        # Fold the block into one lane-row of the tiny resident output block.
        o_ref[0:1, :] += jnp.sum(x, axis=0, keepdims=True)

    if has_tail:
        # Logical (unclamped) position of this grid step; clamped/duplicated
        # blocks land entirely past n_full_rows and are masked to zero.
        start_row = (c * steps_per_part + j) * block_rows
        is_full = start_row + block_rows <= n_full_rows

        @pl.when(is_full)
        def _():
            _accumulate(loss)

        @pl.when(jnp.logical_not(is_full))
        def _():
            rows = start_row + lax.broadcasted_iota(jnp.int32, loss.shape, 0)
            if n_rem == 0:
                valid = rows < n_full_rows
            else:
                cols = lax.broadcasted_iota(jnp.int32, loss.shape, 1)
                valid = (rows < n_full_rows) | (
                    (rows == n_full_rows) & (cols < n_rem))
            _accumulate(jnp.where(valid, loss, 0.0))
    else:
        _accumulate(loss)


def bce_focal_loss(predict, target, gamma=2.0, alpha=0.25, reduction="mean"):
    """BCE focal loss over all elements of `predict`/`target` (any shape)."""
    assert predict.shape == target.shape
    n = int(predict.size)

    p_flat = jnp.ravel(predict)
    t_flat = jnp.ravel(target)

    n_full_rows, n_rem = divmod(n, LANES)
    rows_total = n_full_rows + (1 if n_rem else 0)

    if n_rem:
        # TODO(synk): the sub-128 ragged tail still forces a whole-array pad
        # copy; stream it via memory_space=pl.ANY + a manual make_async_copy
        # of the last partial row instead.
        pad = rows_total * LANES - n
        p_flat = jnp.pad(p_flat, (0, pad))
        t_flat = jnp.pad(t_flat, (0, pad))

    # n % 128 == 0 path: free row-major reshape, no host-side copy at all.
    p2d = p_flat.reshape(rows_total, LANES)
    t2d = t_flat.reshape(rows_total, LANES)

    cores = _num_tensorcores()
    # Split across TensorCores only when each part gets >= 1 full block.
    parts = cores if (cores > 1 and rows_total >= cores * MAX_BLOCK_ROWS) else 1

    if parts == 1 and rows_total <= MAX_BLOCK_ROWS:
        block_rows = rows_total          # single full-extent block (always legal)
    else:
        block_rows = MAX_BLOCK_ROWS

    total_blocks = pl.cdiv(rows_total, block_rows)
    steps_per_part = pl.cdiv(total_blocks, parts)
    covered_rows = parts * steps_per_part * block_rows
    has_tail = covered_rows * LANES != n
    needs_clamp = parts * steps_per_part > total_blocks
    last_block = total_blocks - 1

    if needs_clamp:
        # Keep every DMA in bounds; duplicated blocks are zeroed by the mask.
        def in_map(c, j):
            return (jnp.minimum(c * steps_per_part + j, last_block), 0)
    else:
        def in_map(c, j):
            return (c * steps_per_part + j, 0)

    kernel = functools.partial(
        _focal_loss_kernel, gamma=float(gamma), alpha=float(alpha),
        n_full_rows=n_full_rows, n_rem=n_rem, block_rows=block_rows,
        steps_per_part=steps_per_part, has_tail=has_tail)

    if parts > 1:
        dim_sem = (pltpu.CORE_PARALLEL, pltpu.ARBITRARY)   # both TCs on v7x
    else:
        dim_sem = ("arbitrary", "arbitrary")

    bytes_in = (p2d.size * p2d.dtype.itemsize + t2d.size * t2d.dtype.itemsize)
    cost = pl.CostEstimate(flops=22 * n, transcendentals=3 * n,
                           bytes_accessed=bytes_in + parts * 8 * LANES * 4)

    partials = pl.pallas_call(
        kernel,
        out_shape=jax.ShapeDtypeStruct((parts * 8, LANES), jnp.float32),
        grid_spec=pltpu.PrefetchScalarGridSpec(
            num_scalar_prefetch=0,
            grid=(parts, steps_per_part),
            in_specs=[
                pl.BlockSpec((block_rows, LANES), in_map),
                pl.BlockSpec((block_rows, LANES), in_map),
            ],
            out_specs=pl.BlockSpec((8, LANES), lambda c, j: (c, 0)),
        ),
        compiler_params=pltpu.CompilerParams(
            dimension_semantics=dim_sem,
            vmem_limit_bytes=32 * 1024 * 1024),
        cost_estimate=cost,
    )(p2d, t2d)

    total = jnp.sum(partials)   # tiny (parts*8, 128) slab; negligible reduce
    if reduction == "mean":
        return total / jnp.float32(n)
    elif reduction == "sum":
        return total
    else:
        # TODO(synk): reduction='none' (per-element output) not implemented;
        # only the fused 'mean'/'sum' reductions are supported here.
        raise NotImplementedError("reduction must be 'mean' or 'sum'")


def _reference(predict, target, gamma=2.0, alpha=0.25):
    pt = jax.nn.sigmoid(predict.astype(jnp.float32))
    t = target.astype(jnp.float32)
    loss = (-alpha * (1.0 - pt) ** gamma * t * jnp.log(pt)
            - (1.0 - alpha) * pt ** gamma * (1.0 - t) * jnp.log(1.0 - pt))
    return jnp.mean(loss)


if __name__ == "__main__":
    key = jax.random.PRNGKey(0)

    def _check(shape, salt):
        k1, k2 = jax.random.split(jax.random.fold_in(key, salt))
        predict = jax.random.normal(k1, shape, dtype=jnp.float32)
        target = jax.random.bernoulli(k2, 0.3, shape).astype(jnp.float32)
        loss = jax.block_until_ready(
            bce_focal_loss(predict, target, gamma=2.0, alpha=0.25))
        ref = _reference(predict, target, gamma=2.0, alpha=0.25)
        # rtol accounts for the approximate EUP reciprocal (few-1e-4 level).
        assert jnp.allclose(loss, ref, rtol=2e-3, atol=1e-6), (shape, loss, ref)

    # Primary small case (NCHW-style prediction map), 128-aligned -> no pad.
    _check((2, 4, 16, 16), 0)
    # Ragged total size -> exercises the masked-tail path.
    _check((2, 3, 37, 41), 1)
    # Multi-step grid with a partial final block (aligned, zero host copies).
    _check((8, 9, 96, 96), 2)

    print("KERNEL_OK")
</pallas_src>

<mosaic_0001>
module attributes {stable_mosaic.version = 11 : i64} {
  func.func @_focal_loss_kernel(%arg0: i32, %arg1: i32, %arg2: memref<16x128xf32, #tpu.memory_space<vmem>>, %arg3: memref<16x128xf32, #tpu.memory_space<vmem>>, %arg4: memref<8x128xf32, #tpu.memory_space<vmem>>) attributes {dimension_semantics = [#tpu.dimension_semantics<arbitrary>, #tpu.dimension_semantics<arbitrary>], iteration_bounds = array<i64: 1, 1>, scalar_prefetch = 0 : i64, scratch_operands = 0 : i64, tpu.core_type = #tpu.core_type<tc>, window_params = [{transform_indices = @transform_0, window_bounds = array<i64: 16, 128>}, {transform_indices = @transform_1, window_bounds = array<i64: 16, 128>}, {transform_indices = @transform_2, window_bounds = array<i64: 8, 128>}]} {
    %c0_i32 = arith.constant 0 : i32
    %0 = arith.cmpi eq, %arg1, %c0_i32 : i32
    %1 = arith.extui %0 : i1 to i32
    %c0_i32_0 = arith.constant 0 : i32
    %2 = arith.cmpi ne, %1, %c0_i32_0 : i32
    scf.if %2 {
      %cst_17 = arith.constant 0.000000e+00 : f32
      %42 = vector.broadcast %cst_17 : f32 to vector<8x128xf32>
      %c0_18 = arith.constant 0 : index
      %c0_19 = arith.constant 0 : index
      %43 = vector.load %arg4[%c0_18, %c0_19] : memref<8x128xf32, #tpu.memory_space<vmem>>, vector<8x128xf32>
      tpu.vector_store %arg4[%c0_18, %c0_19], %42 {strides = array<i32>} : memref<8x128xf32, #tpu.memory_space<vmem>>, vector<8x128xf32>,
    } else {
    }
    %c0 = arith.constant 0 : index
    %c0_1 = arith.constant 0 : index
    %3 = vector.load %arg2[%c0, %c0_1] : memref<16x128xf32, #tpu.memory_space<vmem>>, vector<16x128xf32>
    %c0_2 = arith.constant 0 : index
    %c0_3 = arith.constant 0 : index
    %4 = vector.load %arg3[%c0_2, %c0_3] : memref<16x128xf32, #tpu.memory_space<vmem>>, vector<16x128xf32>
    %5 = math.absf %3 : vector<16x128xf32>
    %cst = arith.constant 0.000000e+00 : f32
    %6 = vector.broadcast %cst : f32 to vector<16x128xf32>
    %7 = arith.subf %6, %5 : vector<16x128xf32>
    %8 = math.exp %7 : vector<16x128xf32>
    %cst_4 = arith.constant 1.000000e+00 : f32
    %9 = vector.broadcast %cst_4 : f32 to vector<16x128xf32>
    %10 = arith.addf %9, %8 : vector<16x128xf32>
    %cst_5 = arith.constant 0.000000e+00 : f32
    %11 = vector.broadcast %cst_5 : f32 to vector<16x128xf32>
    %12 = arith.minimumf %3, %11 : vector<16x128xf32>
    %13 = math.log %10 : vector<16x128xf32>
    %14 = arith.subf %12, %13 : vector<16x128xf32>
    %15 = arith.subf %14, %3 : vector<16x128xf32>
    %16 = tpu.reciprocal %10 {approx = true} : vector<16x128xf32> -> vector<16x128xf32>
    %cst_6 = arith.constant 0.000000e+00 : f32
    %17 = vector.broadcast %cst_6 : f32 to vector<16x128xf32>
    %18 = arith.cmpf oge, %3, %17 : vector<16x128xf32>
    %cst_7 = arith.constant 1.000000e+00 : f32
    %19 = vector.broadcast %cst_7 : f32 to vector<16x128xf32>
    %20 = arith.select %18, %19, %8 : vector<16x128xi1>, vector<16x128xf32>
    %21 = arith.mulf %20, %16 : vector<16x128xf32>
    %cst_8 = arith.constant 1.000000e+00 : f32
    %22 = vector.broadcast %cst_8 : f32 to vector<16x128xf32>
    %23 = arith.subf %22, %21 : vector<16x128xf32>
    %24 = arith.mulf %23, %23 : vector<16x128xf32>
    %cst_9 = arith.constant -2.500000e-01 : f32
    %25 = vector.broadcast %cst_9 : f32 to vector<16x128xf32>
    %26 = arith.mulf %25, %24 : vector<16x128xf32>
    %27 = arith.mulf %26, %4 : vector<16x128xf32>
    %28 = arith.mulf %27, %14 : vector<16x128xf32>
    %29 = arith.mulf %21, %21 : vector<16x128xf32>
    %cst_10 = arith.constant 7.500000e-01 : f32
    %30 = vector.broadcast %cst_10 : f32 to vector<16x128xf32>
    %31 = arith.mulf %30, %29 : vector<16x128xf32>
    %cst_11 = arith.constant 1.000000e+00 : f32
    %32 = vector.broadcast %cst_11 : f32 to vector<16x128xf32>
    %33 = arith.subf %32, %4 : vector<16x128xf32>
    %34 = arith.mulf %31, %33 : vector<16x128xf32>
    %35 = arith.mulf %34, %15 : vector<16x128xf32>
    %36 = arith.subf %28, %35 : vector<16x128xf32>
    %c0_12 = arith.constant 0 : index
    %c0_13 = arith.constant 0 : index
    %37 = vector.load %arg4[%c0_12, %c0_13] : memref<8x128xf32, #tpu.memory_space<vmem>>, vector<1x128xf32>
    %cst_14 = arith.constant dense<0.000000e+00> : vector<128xf32>
    %38 = vector.multi_reduction <add>, %36, %cst_14 [0] : vector<16x128xf32> to vector<128xf32>
    %39 = vector.shape_cast %38 : vector<128xf32> to vector<1x128xf32>
    %40 = arith.addf %37, %39 : vector<1x128xf32>
    %c0_15 = arith.constant 0 : index
    %c0_16 = arith.constant 0 : index
    %41 = vector.load %arg4[%c0_15, %c0_16] : memref<8x128xf32, #tpu.memory_space<vmem>>, vector<1x128xf32>
    tpu.vector_store %arg4[%c0_15, %c0_16], %40 {strides = array<i32>} : memref<8x128xf32, #tpu.memory_space<vmem>>, vector<1x128xf32>,
    return
  }
  func.func @transform_0(%arg0: i32, %arg1: i32) -> (i32, i32) {
    %c1_i32 = arith.constant 1 : i32
    %0 = arith.muli %arg0, %c1_i32 : i32
    %1 = arith.addi %0, %arg1 : i32
    %c0_i32 = arith.constant 0 : i32
    %c0_i32_0 = arith.constant 0 : i32
    return %1, %c0_i32 : i32, i32
  }
  func.func @transform_1(%arg0: i32, %arg1: i32) -> (i32, i32) {
    %c1_i32 = arith.constant 1 : i32
    %0 = arith.muli %arg0, %c1_i32 : i32
    %1 = arith.addi %0, %arg1 : i32
    %c0_i32 = arith.constant 0 : i32
    %c0_i32_0 = arith.constant 0 : i32
    return %1, %c0_i32 : i32, i32
  }
  func.func @transform_2(%arg0: i32, %arg1: i32) -> (i32, i32) {
    %c0_i32 = arith.constant 0 : i32
    %c0_i32_0 = arith.constant 0 : i32
    return %arg0, %c0_i32 : i32, i32
  }
}

</mosaic_0001>

<llo_original>
// kernel: tpu_custom_call.1
$region0: #{tpu_custom_call.1}
  #allocation0 [shape = 'u32[]', space=smem, size = 0x4, offset = 0x4, fixed_abs, tag = 'smem constant byte address 0x4 - core index']
  #allocation1 [shape = 'u32[144,128]{1,0:T(1,128)}', space=vmem, size = 0x12000, scoped, tag = 'internal scratch']
  %s0 = inlined_call_operand.hbm [shape: f32[16,128], index: 0, kind: input, shape index: {}]
  %s1 = inlined_call_operand.hbm [shape: f32[16,128], index: 1, kind: input, shape index: {}]
  %s2 = inlined_call_operand.hbm [shape: f32[8,128], index: 2, kind: output, shape index: {}]
  %s3 = sld [smem:[#allocation0]]
  $region30: #{tpu_custom_call.1} parent=0
    _
  %s5 = ssub.s32 1, %s3
  %s6 = scalar_select 0, %s5, %s3
  $region1: #{tpu_custom_call.1} parent=0
    #allocation2 [shape = 'u8[8192]{0}', space=vmem, size = 0x2000, scoped, tag = 'input window, operand 0, single buffered']
    #allocation3 [shape = 's32[1]{0}', space=sflag, size = 0x4, scoped, tag = 'scoped memory for tpu_custom_call.1']
    #allocation4 [shape = 's32[1]{0}', space=sflag, size = 0x4, scoped, tag = 'scoped memory for tpu_custom_call.1']
    #allocation5 [shape = 'u8[8192]{0}', space=vmem, size = 0x2000, scoped, tag = 'input window, operand 1, single buffered']
    #allocation6 [shape = 's32[1]{0}', space=sflag, size = 0x4, scoped, tag = 'scoped memory for tpu_custom_call.1']
    #allocation7 [shape = 'u8[4096]{0}', space=vmem, size = 0x1000, scoped, tag = 'output window, operand 0, single buffered']
    %7 = vsyncpa [#allocation3], 0
    %8 = vsyncpa [#allocation6], 0
    %9 = vsyncpa [#allocation4], 0
    // Predicated region
    $region2: #{tpu_custom_call.1} parent=1 // pred_check
      _
    $region3: #{tpu_custom_call.1} parent=1 // pred_check_branch
      %11 = sbr.rel (0) target = $region5
    $region4: #{tpu_custom_call.1} parent=1 // pred_region
      %s12 = sadd.s32 0, 0
      %s13 = smul.u32 2, %s12
      %s15 = ssub.s32 256, 256
      %16 = vsyncadd [#allocation3], %s15
      %s17 = smul.addr %s13, 128
      %s18 = scalar_lea.hbm %s0, %s17
      %s19 = sshll.u32 [#allocation2], 4
      %s20 = int_to_ptr.vmem [resolvable:$true] %s19
      %25 = dma.hbm_to_vmem [thread:$0]  %s18, 256, %s20, [#allocation3], 128, 128, 8
    $region5: #{tpu_custom_call.1} parent=1 // pred_fallthru
      _
    // Predicated region
    $region6: #{tpu_custom_call.1} parent=1 // pred_check
      _
    $region7: #{tpu_custom_call.1} parent=1 // pred_check_branch
      %27 = sbr.rel (0) target = $region9
    $region8: #{tpu_custom_call.1} parent=1 // pred_region
      %s28 = sadd.s32 0, 0
      %s29 = smul.u32 2, %s28
      %s31 = ssub.s32 256, 256
      %32 = vsyncadd [#allocation6], %s31
      %s33 = smul.addr %s29, 128
      %s34 = scalar_lea.hbm %s1, %s33
      %s35 = sshll.u32 [#allocation5], 4
      %s36 = int_to_ptr.vmem [resolvable:$true] %s35
      %41 = dma.hbm_to_vmem [thread:$0]  %s34, 256, %s36, [#allocation6], 128, 128, 8
    $region9: #{tpu_custom_call.1} parent=1 // pred_fallthru
      _
    // Predicated region
    $region10: #{tpu_custom_call.1} parent=1 // pred_check
      _
    $region11: #{tpu_custom_call.1} parent=1 // pred_check_branch
      %43 = sbr.rel (0) target = $region13
    $region12: #{tpu_custom_call.1} parent=1 // pred_region
      %44 = dma.done [#allocation3], 256
    $region13: #{tpu_custom_call.1} parent=1 // pred_fallthru
      _
    // Predicated region
    $region14: #{tpu_custom_call.1} parent=1 // pred_check
      _
    $region15: #{tpu_custom_call.1} parent=1 // pred_check_branch
      %46 = sbr.rel (0) target = $region17
    $region16: #{tpu_custom_call.1} parent=1 // pred_region
      %47 = dma.done [#allocation6], 256
    $region17: #{tpu_custom_call.1} parent=1 // pred_fallthru
      _
    %s48 = sadd.s32 0, 0
    %s49 = smul.u32 2, %s48
    %s50 = sadd.s32 0, 0
    %s51 = smul.u32 2, %s50
    %p52 = scmp.eq.s32.totalorder 0, 0
    // Predicated region
    $region18: #{tpu_custom_call.1} parent=1 // pred_check
      %p53 = pneg %p52
    $region19: #{tpu_custom_call.1} parent=1 // pred_check_branch
      %55 = sbr.rel (%p53) target = $region21
    $region20: #{tpu_custom_call.1} parent=1 // pred_region
      %56 = vst [vmem:[#allocation7] sm:$0xff] 0.0
    $region21: #{tpu_custom_call.1} parent=1 // pred_fallthru
      _
    %v57 = vld [vmem:[#allocation2] sm:$0xff]
    %v58 = vld [vmem:[#allocation2 + $0x8] sm:$0xff]
    %v59 = vld [vmem:[#allocation5] sm:$0xff]
    %v60 = vld [vmem:[#allocation5 + $0x8] sm:$0xff]
    %v61 = vand.u32 2147483647, %v57
    %v62 = vand.u32 2147483647, %v58
    %v63 = vsub.f32 0.0, %v61
    %v64 = vsub.f32 0.0, %v62
    %v65 = vmul.f32 %v63, 1.442695
    %v66 = vpow.pop %v65
    %v67 = vmul.f32 %v64, 1.442695
    %v68 = vpow.pop %v67
    %v69 = vadd.f32 %v66, 1.0
    %v70 = vadd.f32 %v68, 1.0
    %v71 = vmin.f32 %v57, 0.0
    %v72 = vmin.f32 %v58, 0.0
    %v73 = vlog2.pop %v69
    %v74 = vmul.f32 %v73, 0.6931472
    %v75 = vlog2.pop %v70
    %v76 = vmul.f32 %v75, 0.6931472
    %v77 = vsub.f32 %v71, %v74
    %v78 = vsub.f32 %v72, %v76
    %v79 = vsub.f32 %v77, %v57
    %v80 = vsub.f32 %v78, %v58
    %v81 = vrcp.pop %v69
    %v82 = vrcp.pop %v70
    %vm83 = vcmp.ge.f32.partialorder %v57, 0.0
    %vm84 = vcmp.ge.f32.partialorder %v58, 0.0
    %v85 = vsel %vm83, 1.0, %v66
    %v86 = vsel %vm84, 1.0, %v68
    %v87 = vmul.f32 %v85, %v81
    %v88 = vmul.f32 %v86, %v82
    %v89 = vsub.f32 1.0, %v87
    %v90 = vsub.f32 1.0, %v88
    %v91 = vmul.f32 %v89, %v89
    %v92 = vmul.f32 %v90, %v90
    %v93 = vmul.f32 %v91, -0.25
    %v94 = vmul.f32 %v92, -0.25
    %v95 = vmul.f32 %v93, %v59
    %v96 = vmul.f32 %v94, %v60
    %v97 = vmul.f32 %v95, %v77
    %v98 = vmul.f32 %v96, %v78
    %v99 = vmul.f32 %v87, %v87
    %v100 = vmul.f32 %v88, %v88
    %v101 = vmul.f32 %v99, 0.75
    %v102 = vmul.f32 %v100, 0.75
    %v103 = vsub.f32 1.0, %v59
    %v104 = vsub.f32 1.0, %v60
    %v105 = vmul.f32 %v101, %v103
    %v106 = vmul.f32 %v102, %v104
    %v107 = vmul.f32 %v105, %v79
    %v108 = vmul.f32 %v106, %v80
    %v109 = vsub.f32 %v97, %v107
    %v110 = vsub.f32 %v98, %v108
    %v111 = vld [vmem:[#allocation7] sm:$0x1]
    %v112 = vadd.f32 %v109, %v110
    %v113 = vrot.slane %v112, 4
    %v114 = vadd.f32 %v112, %v113
    %v115 = vrot.slane %v114, 2
    %v116 = vadd.f32 %v114, %v115
    %v117 = vrot.slane %v116, 1
    %v118 = vadd.f32 %v116, %v117
    %v119 = vadd.f32 %v111, %v118
    %120 = vst [vmem:[#allocation7] sm:$0x1] %v119
    // Predicated region
    $region22: #{tpu_custom_call.1} parent=1 // pred_check
      _
    $region23: #{tpu_custom_call.1} parent=1 // pred_check_branch
      %122 = sbr.rel (0) target = $region25
    $region24: #{tpu_custom_call.1} parent=1 // pred_region
      %s124 = ssub.s32 128, 128
      %125 = vsyncadd [#allocation4], %s124
      %s127 = sshll.u32 [#allocation7], 4
      %s128 = int_to_ptr.vmem [resolvable:$true] %s127
      %130 = dma.vmem_to_hbm [thread:$0]  %s128, 128, %s2, [#allocation4]
    $region25: #{tpu_custom_call.1} parent=1 // pred_fallthru
      _
    // Predicated region
    $region26: #{tpu_custom_call.1} parent=1 // pred_check
      _
    $region27: #{tpu_custom_call.1} parent=1 // pred_check_branch
      %132 = sbr.rel (0) target = $region29
    $region28: #{tpu_custom_call.1} parent=1 // pred_region
      %133 = dma.done [#allocation4], 128
    $region29: #{tpu_custom_call.1} parent=1 // pred_fallthru
      _
    %134 = vsyncpa [#allocation3], 1
    %135 = vsyncpa [#allocation6], 1
    %136 = vsyncpa [#allocation4], 1

</llo_original>
